<compile_context>
chip_gen: v6e
topology: v6e:2x2x1
jax: 0.10.0
libtpu: 0.0.40
codegen_flags: <defaults>
</compile_context>

<pallas_src>
import jax
import jax.numpy as jnp
from jax.experimental import pallas as pl
from jax.experimental.pallas import tpu as pltpu


def _round_up(x, m):
    return (x + m - 1) // m * m


def _largest_tile(dim, cap):
    """Largest multiple of 128 that divides `dim` (a 128-multiple) and is <= cap."""
    t = min(cap, dim)
    t -= t % 128
    while t > 128 and dim % t != 0:
        t -= 128
    return max(t, 128)


def _pick_tm(B):
    """Batch tile: single block for small B; >=2 blocks for B > 512 (v7x megacore)."""
    if B <= 512:
        return B
    if B <= 2048:
        return 512
    return 1024


# --------------------------------------------------------------------------- #
# Kernels
# --------------------------------------------------------------------------- #
def _linear_kernel_fused(x_ref, w_ref, b_ref, o_ref):
    """Single-shot tile: out = x @ W_t + b (whole reduction in one block)."""
    acc = jnp.dot(x_ref[...], w_ref[...], preferred_element_type=jnp.float32)
    o_ref[...] = (acc + b_ref[...].astype(jnp.float32)).astype(o_ref.dtype)


def _linear_kernel_ktiled(x_ref, w_ref, b_ref, o_ref, acc_ref):
    """(i, j, k) grid step with f32 VMEM accumulator resident across k."""
    k = pl.program_id(2)

    @pl.when(k == 0)
    def _init():
        # Fold bias into the accumulator init (one broadcast per output tile).
        acc_ref[...] = jnp.broadcast_to(
            b_ref[...].astype(jnp.float32), acc_ref.shape)

    acc_ref[...] += jnp.dot(
        x_ref[...], w_ref[...], preferred_element_type=jnp.float32)

    @pl.when(k == pl.num_programs(2) - 1)
    def _store():
        o_ref[...] = acc_ref[...].astype(o_ref.dtype)


# --------------------------------------------------------------------------- #
# Wrapper
# --------------------------------------------------------------------------- #
_FAST_K_MAX = 2048   # whole reduction fits in one VMEM block
_FAST_N_MAX = 512    # whole output width fits in one VMEM block


@jax.jit
def linear_forward(x, w_t, b):
    """x: [B, D_in], w_t: [D_in, D_out], b: [1, D_out] -> [B, D_out]."""
    B, D_in = x.shape
    D_out = w_t.shape[1]
    out_dtype = x.dtype
    itemsize = jnp.dtype(out_dtype).itemsize

    cost = pl.CostEstimate(
        flops=2 * B * D_in * D_out,
        transcendentals=0,
        bytes_accessed=itemsize * (B * D_in + D_in * D_out + B * D_out + D_out),
    )

    # ------------------------- fast path (common case) ---------------------- #
    if D_in <= _FAST_K_MAX and D_out <= _FAST_N_MAX:
        tm = _pick_tm(B)
        grid = (pl.cdiv(B, tm),)

        # double-buffered x / W / b blocks + double-buffered output block
        footprint = itemsize * (
            2 * tm * D_in + 2 * D_in * D_out + 2 * D_out + 2 * tm * D_out)
        vmem_limit = int(min(max(2 * footprint, 16 << 20), 48 << 20))

        return pl.pallas_call(
            _linear_kernel_fused,
            out_shape=jax.ShapeDtypeStruct((B, D_out), out_dtype),
            grid_spec=pltpu.PrefetchScalarGridSpec(
                num_scalar_prefetch=0,
                grid=grid,
                in_specs=[
                    pl.BlockSpec((tm, D_in), lambda i: (i, 0)),
                    pl.BlockSpec((D_in, D_out), lambda i: (0, 0)),
                    pl.BlockSpec((1, D_out), lambda i: (0, 0)),
                ],
                out_specs=pl.BlockSpec((tm, D_out), lambda i: (i, 0)),
            ),
            compiler_params=pltpu.CompilerParams(
                dimension_semantics=("parallel",),
                vmem_limit_bytes=vmem_limit,
            ),
            cost_estimate=cost,
        )(x, w_t, b)

    # --------------------- general fallback (large dims) -------------------- #
    K_p = _round_up(D_in, 128)
    tk = _largest_tile(K_p, 512)          # tk divides K_p exactly (no K inflation)
    if D_out <= _FAST_N_MAX:
        N_p, tn = D_out, D_out            # full-width output, no N padding
    else:
        N_p = _round_up(D_out, 128)
        tn = _largest_tile(N_p, 512)
    tm = _pick_tm(B)

    if K_p != D_in:
        x = jnp.pad(x, ((0, 0), (0, K_p - D_in)))
    if (K_p, N_p) != tuple(w_t.shape):
        w_t = jnp.pad(w_t, ((0, K_p - D_in), (0, N_p - D_out)))
    if N_p != b.shape[1]:
        b = jnp.pad(b, ((0, 0), (0, N_p - D_out)))

    grid = (pl.cdiv(B, tm), N_p // tn, K_p // tk)

    footprint = (itemsize * (2 * tm * tk + 2 * tk * tn + 2 * tn + 2 * tm * tn)
                 + 4 * tm * tn)
    vmem_limit = int(min(max(2 * footprint, 16 << 20), 48 << 20))

    out = pl.pallas_call(
        _linear_kernel_ktiled,
        out_shape=jax.ShapeDtypeStruct((B, N_p), out_dtype),
        grid_spec=pltpu.PrefetchScalarGridSpec(
            num_scalar_prefetch=0,
            grid=grid,
            in_specs=[
                pl.BlockSpec((tm, tk), lambda i, j, k: (i, k)),
                pl.BlockSpec((tk, tn), lambda i, j, k: (k, j)),
                pl.BlockSpec((1, tn), lambda i, j, k: (0, j)),
            ],
            out_specs=pl.BlockSpec((tm, tn), lambda i, j, k: (i, j)),
            scratch_shapes=[pltpu.VMEM((tm, tn), jnp.float32)],
        ),
        compiler_params=pltpu.CompilerParams(
            dimension_semantics=("parallel", "parallel", "arbitrary"),
            vmem_limit_bytes=vmem_limit,
        ),
        cost_estimate=cost,
    )(x, w_t, b)

    return out if N_p == D_out else out[:, :D_out]


class LinearRegressionPallas:
    """Mirror of the PyTorch module: out = self.linear(x)."""

    def __init__(self, input_dim, output_dim=1, key=jax.random.PRNGKey(0)):
        kw, kb = jax.random.split(key)
        # nn.Linear default init: U(-1/sqrt(in), 1/sqrt(in)).
        bound = 1.0 / jnp.sqrt(jnp.float32(input_dim))
        # PyTorch weight is [output_dim, input_dim]; store transposed for the kernel.
        w = jax.random.uniform(kw, (output_dim, input_dim), jnp.float32, -bound, bound)
        bias = jax.random.uniform(kb, (output_dim,), jnp.float32, -bound, bound)
        self.w_t = jnp.transpose(w)              # [input_dim, output_dim]
        self.b = bias.reshape(1, output_dim)     # broadcast row

    def __call__(self, x):
        return linear_forward(x, self.w_t, self.b)


if __name__ == "__main__":
    key = jax.random.PRNGKey(0)
    k_params, k_x, k_x2, k_x3 = jax.random.split(key, 4)

    # Small shapes implied by the module: batch=8, input_dim=32, output_dim=1.
    batch, input_dim, output_dim = 8, 32, 1
    model = LinearRegressionPallas(input_dim, output_dim, key=k_params)
    x = jax.random.normal(k_x, (batch, input_dim), dtype=jnp.float32)
    out = jax.block_until_ready(model(x))
    ref = x @ model.w_t + model.b
    assert out.shape == (batch, output_dim)
    assert jnp.allclose(out, ref, atol=2e-2, rtol=2e-2), "fast path (aligned) mismatch"

    # Non-divisible batch + unaligned feature dim: boundary-masked last i block,
    # no wrapper-side padding of x and no output slice copy.
    B2, D2_in, D2_out = 1000, 600, 5
    model2 = LinearRegressionPallas(D2_in, D2_out, key=k_params)
    x2 = jax.random.normal(k_x2, (B2, D2_in), dtype=jnp.float32)
    out2 = jax.block_until_ready(model2(x2))
    ref2 = x2 @ model2.w_t + model2.b
    assert out2.shape == (B2, D2_out)
    assert jnp.allclose(out2, ref2, atol=2e-2, rtol=2e-2), "fast path (ragged) mismatch"

    # Large D_in exercises the k-tiled fallback with the f32 VMEM accumulator.
    B3, D3_in, D3_out = 64, 2560, 3
    model3 = LinearRegressionPallas(D3_in, D3_out, key=k_params)
    x3 = jax.random.normal(k_x3, (B3, D3_in), dtype=jnp.float32)
    out3 = jax.block_until_ready(model3(x3))
    ref3 = x3 @ model3.w_t + model3.b
    assert out3.shape == (B3, D3_out)
    assert jnp.allclose(out3, ref3, atol=2e-2, rtol=2e-2), "k-tiled fallback mismatch"

    print("KERNEL_OK")
</pallas_src>

<mosaic_0001>
module attributes {stable_mosaic.version = 11 : i64} {
  func.func @_linear_kernel_fused(%arg0: i32, %arg1: memref<8x32xf32, #tpu.memory_space<vmem>>, %arg2: memref<32x1xf32, #tpu.memory_space<vmem>>, %arg3: memref<1x1xf32, #tpu.memory_space<vmem>>, %arg4: memref<8x1xf32, #tpu.memory_space<vmem>>) attributes {dimension_semantics = [#tpu.dimension_semantics<parallel>], iteration_bounds = array<i64: 1>, scalar_prefetch = 0 : i64, scratch_operands = 0 : i64, tpu.core_type = #tpu.core_type<tc>, window_params = [{transform_indices = @transform_0, window_bounds = array<i64: 8, 32>}, {pipeline_mode = #tpu.pipeline_mode<synchronous>, transform_indices = @transform_1, window_bounds = array<i64: 32, 1>}, {pipeline_mode = #tpu.pipeline_mode<synchronous>, transform_indices = @transform_2, window_bounds = array<i64: 1, 1>}, {transform_indices = @transform_3, window_bounds = array<i64: 8, 1>}]} {
    %c0 = arith.constant 0 : index
    %c0_0 = arith.constant 0 : index
    %0 = vector.load %arg1[%c0, %c0_0] : memref<8x32xf32, #tpu.memory_space<vmem>>, vector<8x32xf32>
    %c0_1 = arith.constant 0 : index
    %c0_2 = arith.constant 0 : index
    %1 = vector.load %arg2[%c0_1, %c0_2] : memref<32x1xf32, #tpu.memory_space<vmem>>, vector<32x1xf32>
    %cst = arith.constant dense<0.000000e+00> : vector<8x1xf32>
    %2 = tpu.matmul %0, %1, %cst {dimension_numbers = #tpu.dot_dimension_numbers<[1], [0], [0], [1], [0, 0, 1, 1], [], []>} : vector<8x32xf32>, vector<32x1xf32>, vector<8x1xf32> -> vector<8x1xf32>
    %c0_3 = arith.constant 0 : index
    %c0_4 = arith.constant 0 : index
    %3 = vector.load %arg3[%c0_3, %c0_4] : memref<1x1xf32, #tpu.memory_space<vmem>>, vector<1x1xf32>
    %4 = vector.broadcast %3 : vector<1x1xf32> to vector<8x1xf32>
    %5 = arith.addf %2, %4 : vector<8x1xf32>
    %c0_5 = arith.constant 0 : index
    %c0_6 = arith.constant 0 : index
    %6 = vector.load %arg4[%c0_5, %c0_6] : memref<8x1xf32, #tpu.memory_space<vmem>>, vector<8x1xf32>
    tpu.vector_store %arg4[%c0_5, %c0_6], %5 {strides = array<i32>} : memref<8x1xf32, #tpu.memory_space<vmem>>, vector<8x1xf32>,
    return
  }
  func.func @transform_0(%arg0: i32) -> (i32, i32) {
    %c0_i32 = arith.constant 0 : i32
    %c0_i32_0 = arith.constant 0 : i32
    return %arg0, %c0_i32 : i32, i32
  }
  func.func @transform_1(%arg0: i32) -> (i32, i32) {
    %c0_i32 = arith.constant 0 : i32
    %c0_i32_0 = arith.constant 0 : i32
    %c0_i32_1 = arith.constant 0 : i32
    return %c0_i32, %c0_i32_0 : i32, i32
  }
  func.func @transform_2(%arg0: i32) -> (i32, i32) {
    %c0_i32 = arith.constant 0 : i32
    %c0_i32_0 = arith.constant 0 : i32
    %c0_i32_1 = arith.constant 0 : i32
    return %c0_i32, %c0_i32_0 : i32, i32
  }
  func.func @transform_3(%arg0: i32) -> (i32, i32) {
    %c0_i32 = arith.constant 0 : i32
    %c0_i32_0 = arith.constant 0 : i32
    return %arg0, %c0_i32 : i32, i32
  }
}

</mosaic_0001>

<llo_original>
// kernel: linear_forward.1
$region0: #{linear_forward.1}
  #allocation0 [shape = 'u32[]', space=smem, size = 0x4, offset = 0x4, fixed_abs, tag = 'smem constant byte address 0x4 - core index']
  #allocation1 [shape = 'u32[144,128]{1,0:T(1,128)}', space=vmem, size = 0x12000, scoped, tag = 'internal scratch']
  #allocation2 [shape = 'f32[1,1]{1,0:T(1,128)S(1)}', space=vmem, size = 0x200, scoped, tag = 'scoped memory for linear_forward.1']
  %s0 = inlined_call_operand.vmem [shape: f32[8,32], index: 0, kind: input, shape index: {}]
  %s1 = inlined_call_operand.vmem [shape: f32[32,1], index: 1, kind: input, shape index: {}]
  %s2 = inlined_call_operand.<no memory space> [shape: f32[1,1], index: 2, kind: input, shape index: {}]
  %s3 = inlined_call_operand.vmem [shape: f32[8,1], index: 3, kind: output, shape index: {}]
  %s4 = sld [smem:[#allocation0]]
  $region22: #{linear_forward.1} parent=0
    _
  %s6 = ssub.s32 1, %s4
  %s7 = scalar_select 0, %s6, %s4
  %v8 = vstv %s2
  %9 = vst [vmem:[#allocation2] sm:$0x1] %v8
  // Predicated region
  $region2: #{linear_forward.1} parent=0 // pred_check
    _
  $region3: #{linear_forward.1} parent=0 // pred_check_branch
    %11 = sbr.rel (0) target = $region5
  $region4: #{linear_forward.1} parent=0 // pred_region
    _
  $region5: #{linear_forward.1} parent=0 // pred_fallthru
    _
  // Predicated region
  $region6: #{linear_forward.1} parent=0 // pred_check
    _
  $region7: #{linear_forward.1} parent=0 // pred_check_branch
    %13 = sbr.rel (0) target = $region9
  $region8: #{linear_forward.1} parent=0 // pred_region
    _
  $region9: #{linear_forward.1} parent=0 // pred_fallthru
    _
  // Predicated region
  $region10: #{linear_forward.1} parent=0 // pred_check
    _
  $region11: #{linear_forward.1} parent=0 // pred_check_branch
    %15 = sbr.rel (0) target = $region13
  $region12: #{linear_forward.1} parent=0 // pred_region
    _
  $region13: #{linear_forward.1} parent=0 // pred_fallthru
    _
  %v16 = vld [vmem:[%s0] sm:$0xff]
  %v17 = vld [vmem:[%s1] sm:$0xff]
  %v18 = vld [vmem:[%s1 + $0x8] sm:$0xff]
  %v19 = vld [vmem:[%s1 + $0x10] sm:$0xff]
  %v20 = vld [vmem:[%s1 + $0x18] sm:$0xff]
  %v21 = vld [vmem:[#allocation2] sm:$0x1]
  %v23 = vlaneseq
  %v24 = vshrl.u32 %v23, 7
  %v25 = vsub.s32 0, %v24
  %v26 = vrot.slane %v21, %v25
  %vm28 = vcmask 261120
  %v30 = vsel %vm28, %v16, 0
  %32 = vmatprep.subr.mxu0 0.0
  %33 = vmatpush1.msra.mxu0 0.0
  %34 = vmatprep.subr.mxu0 0.0
  %35 = vmatpush1.msra.mxu0 0.0
  %36 = vmatprep.subr.mxu0 0.0
  %37 = vmatpush1.msra.mxu0 0.0
  %38 = vmatprep.subr.mxu0 0.0
  %39 = vmatpush1.msra.mxu0 0.0
  %40 = vmatprep.subr.mxu0 0.0
  %41 = vmatpush1.msra.mxu0 0.0
  %42 = vmatprep.subr.mxu0 0.0
  %43 = vmatpush1.msra.mxu0 0.0
  %44 = vmatprep.subr.mxu0 0.0
  %45 = vmatpush1.msra.mxu0 0.0
  %46 = vmatprep.subr.mxu0 0.0
  %47 = vmatpush1.msra.mxu0 0.0
  %48 = vmatprep.subr.mxu0 0.0
  %49 = vmatpush1.msra.mxu0 0.0
  %50 = vmatprep.subr.mxu0 0.0
  %51 = vmatpush1.msra.mxu0 0.0
  %52 = vmatprep.subr.mxu0 0.0
  %53 = vmatpush1.msra.mxu0 0.0
  %54 = vmatprep.subr.mxu0 0.0
  %55 = vmatpush1.msra.mxu0 0.0
  %56 = vmatprep.subr.mxu0 0.0
  %57 = vmatpush1.msra.mxu0 %v20
  %58 = vmatprep.subr.mxu0 0.0
  %59 = vmatpush1.msra.mxu0 %v19
  %60 = vmatprep.subr.mxu0 0.0
  %61 = vmatpush1.msra.mxu0 %v18
  %62 = vmatprep.subr.mxu0 0.0
  %63 = vmatpush1.msra.mxu0 %v17
  %64 = vmatprep.subr.mxu0 0.0
  %65 = vmatpush2.msra.mxu0 0.0
  %66 = vmatprep.subr.mxu0 0.0
  %67 = vmatpush2.msra.mxu0 0.0
  %68 = vmatprep.subr.mxu0 0.0
  %69 = vmatpush2.msra.mxu0 0.0
  %70 = vmatprep.subr.mxu0 0.0
  %71 = vmatpush2.msra.mxu0 0.0
  %72 = vmatprep.subr.mxu0 0.0
  %73 = vmatpush2.msra.mxu0 0.0
  %74 = vmatprep.subr.mxu0 0.0
  %75 = vmatpush2.msra.mxu0 0.0
  %76 = vmatprep.subr.mxu0 0.0
  %77 = vmatpush2.msra.mxu0 0.0
  %78 = vmatprep.subr.mxu0 0.0
  %79 = vmatpush2.msra.mxu0 0.0
  %80 = vmatprep.subr.mxu0 0.0
  %81 = vmatpush2.msra.mxu0 0.0
  %82 = vmatprep.subr.mxu0 0.0
  %83 = vmatpush2.msra.mxu0 0.0
  %84 = vmatprep.subr.mxu0 0.0
  %85 = vmatpush2.msra.mxu0 0.0
  %86 = vmatprep.subr.mxu0 0.0
  %87 = vmatpush2.msra.mxu0 0.0
  %88 = vmatprep.subr.mxu0 0.0
  %89 = vmatpush2.msra.mxu0 0.0
  %90 = vmatprep.subr.mxu0 0.0
  %91 = vmatpush2.msra.mxu0 0.0
  %92 = vmatprep.subr.mxu0 0.0
  %93 = vmatpush2.msra.mxu0 0.0
  %94 = vmatprep.subr.mxu0 0.0
  %95 = vmatpush2.msra.mxu0 0.0
  %96 = vmatprep.mubr.f32.mxu0 0.0
  %97 = vmatmul.mubr.f32.gmra.mxu0 %v30
  %v98 = vpop.f32.mrf.mxu0
  %v99 = vadd.f32 %v26, %v98
  %v100 = vpop.f32.mrf.mxu0
  %101 = vdwg.mxu0
  %vm102 = vcmask 7168
  %103 = vst.msk [vmem:[%s3] sm:$0xff] %vm102, %v99
  // Predicated region
  $region14: #{linear_forward.1} parent=0 // pred_check
    _
  $region15: #{linear_forward.1} parent=0 // pred_check_branch
    %105 = sbr.rel (0) target = $region17
  $region16: #{linear_forward.1} parent=0 // pred_region
    _
  $region17: #{linear_forward.1} parent=0 // pred_fallthru
    _
  // Predicated region
  $region18: #{linear_forward.1} parent=0 // pred_check
    _
  $region19: #{linear_forward.1} parent=0 // pred_check_branch
    %107 = sbr.rel (0) target = $region21
  $region20: #{linear_forward.1} parent=0 // pred_region
    _
  $region21: #{linear_forward.1} parent=0 // pred_fallthru
    _

</llo_original>
